<compile_context>
chip_gen: v7x
topology: tpu7x:2x2x1
jax: 0.10.0
libtpu: 0.0.40
codegen_flags: <defaults>
</compile_context>

<pallas_src>
from functools import partial

import jax
import jax.numpy as jnp
from jax import lax
from jax.experimental import pallas as pl
from jax.experimental.pallas import tpu as pltpu


def _round_up(x, m):
    return (x + m - 1) // m * m


_VMEM_LIMIT = 32 * 1024 * 1024  # safe on v5e/v6e/v7x; raise to ~64 MiB on v5e/v6e
                                # if TILE_L is pushed to 1024+.


# ---------------------------------------------------------------------------
# Pass 1 (dense, groups=1): one wide MXU matmul per (sample, L-tile) + f32
# bias, bf16 writeback, and per-channel sum / sum-of-squares accumulated in
# (Cout, TILE_L) f32 VMEM scratch, reduced once at the last L tile.
# Zero-padded tail lanes produce exactly `bias`; corrected in the wrapper.
# ---------------------------------------------------------------------------
def _dense_conv_stats_kernel(x_ref, w_ref, b_ref, y_ref, s1_ref, s2_ref,
                             acc1_ref, acc2_ref):
    j = pl.program_id(1)

    @pl.when(j == 0)
    def _init():
        acc1_ref[...] = jnp.zeros(acc1_ref.shape, acc1_ref.dtype)
        acc2_ref[...] = jnp.zeros(acc2_ref.shape, acc2_ref.dtype)

    x = x_ref[0]                                   # (KC, TILE_L)   bf16
    w = w_ref[...]                                 # (Cout, KC)     bf16
    y = lax.dot_general(w, x,
                        dimension_numbers=(((1,), (0,)), ((), ())),
                        preferred_element_type=jnp.float32)  # (Cout, TILE_L) f32
    y = y + b_ref[...]                             # (Cout, 1) broadcast, f32
    y_ref[0] = y.astype(y_ref.dtype)               # bf16 writeback

    acc1_ref[...] += y
    acc2_ref[...] += y * y

    @pl.when(j == pl.num_programs(1) - 1)
    def _finalize():
        s1_ref[0] = jnp.sum(acc1_ref[...], axis=1, keepdims=True)
        s2_ref[0] = jnp.sum(acc2_ref[...], axis=1, keepdims=True)


# ---------------------------------------------------------------------------
# Pass 1 (depthwise, groups == channels): VPU multiply-add over the K taps.
# ---------------------------------------------------------------------------
def _dw_conv_stats_kernel(x_ref, w_ref, b_ref, y_ref, s1_ref, s2_ref,
                          acc1_ref, acc2_ref, *, k_taps):
    j = pl.program_id(1)

    @pl.when(j == 0)
    def _init():
        acc1_ref[...] = jnp.zeros(acc1_ref.shape, acc1_ref.dtype)
        acc2_ref[...] = jnp.zeros(acc2_ref.shape, acc2_ref.dtype)

    y = jnp.zeros(y_ref.shape[1:], jnp.float32)            # (C, TILE_L)
    for k in range(k_taps):                                # static, K <= 5
        y = y + x_ref[0, k].astype(jnp.float32) * w_ref[k].astype(jnp.float32)
    y = y + b_ref[...]
    y_ref[0] = y.astype(y_ref.dtype)                       # bf16 writeback

    acc1_ref[...] += y
    acc2_ref[...] += y * y

    @pl.when(j == pl.num_programs(1) - 1)
    def _finalize():
        s1_ref[0] = jnp.sum(acc1_ref[...], axis=1, keepdims=True)
        s2_ref[0] = jnp.sum(acc2_ref[...], axis=1, keepdims=True)


# ---------------------------------------------------------------------------
# Pass 2: y * scale + shift (+ ReLU), tiled identically to pass 1.
# ---------------------------------------------------------------------------
def _scale_shift_act_kernel(y_ref, scale_ref, shift_ref, o_ref, *, relu):
    y = y_ref[0].astype(jnp.float32)
    y = y * scale_ref[...] + shift_ref[...]
    if relu:
        y = jnp.maximum(y, 0.0)
    o_ref[0] = y.astype(o_ref.dtype)


# ---------------------------------------------------------------------------
# pallas_call wrappers
# ---------------------------------------------------------------------------
def _pass1_dense(xcol, w2, bias_col, *, tile_l):
    N, KC, L_p = xcol.shape
    Cout = w2.shape[0]
    grid = (N, L_p // tile_l)
    return pl.pallas_call(
        _dense_conv_stats_kernel,
        grid=grid,
        in_specs=[
            pl.BlockSpec((1, KC, tile_l), lambda n, j: (n, 0, j)),
            pl.BlockSpec((Cout, KC), lambda n, j: (0, 0)),
            pl.BlockSpec((Cout, 1), lambda n, j: (0, 0)),
        ],
        out_specs=[
            pl.BlockSpec((1, Cout, tile_l), lambda n, j: (n, 0, j)),
            pl.BlockSpec((1, Cout, 1), lambda n, j: (n, 0, 0)),   # resident over j
            pl.BlockSpec((1, Cout, 1), lambda n, j: (n, 0, 0)),   # resident over j
        ],
        out_shape=[
            jax.ShapeDtypeStruct((N, Cout, L_p), jnp.bfloat16),   # bf16 intermediate
            jax.ShapeDtypeStruct((N, Cout, 1), jnp.float32),
            jax.ShapeDtypeStruct((N, Cout, 1), jnp.float32),
        ],
        scratch_shapes=[pltpu.VMEM((Cout, tile_l), jnp.float32),
                        pltpu.VMEM((Cout, tile_l), jnp.float32)],
        compiler_params=pltpu.CompilerParams(
            dimension_semantics=("parallel", "arbitrary"),
            vmem_limit_bytes=_VMEM_LIMIT),
    )(xcol, w2, bias_col)


def _pass1_depthwise(xtap, wk, bias_col, *, tile_l):
    N, K, C, L_p = xtap.shape
    grid = (N, L_p // tile_l)
    return pl.pallas_call(
        partial(_dw_conv_stats_kernel, k_taps=K),
        grid=grid,
        in_specs=[
            pl.BlockSpec((1, K, C, tile_l), lambda n, j: (n, 0, 0, j)),
            pl.BlockSpec((K, C, 1), lambda n, j: (0, 0, 0)),
            pl.BlockSpec((C, 1), lambda n, j: (0, 0)),
        ],
        out_specs=[
            pl.BlockSpec((1, C, tile_l), lambda n, j: (n, 0, j)),
            pl.BlockSpec((1, C, 1), lambda n, j: (n, 0, 0)),
            pl.BlockSpec((1, C, 1), lambda n, j: (n, 0, 0)),
        ],
        out_shape=[
            jax.ShapeDtypeStruct((N, C, L_p), jnp.bfloat16),      # bf16 intermediate
            jax.ShapeDtypeStruct((N, C, 1), jnp.float32),
            jax.ShapeDtypeStruct((N, C, 1), jnp.float32),
        ],
        scratch_shapes=[pltpu.VMEM((C, tile_l), jnp.float32),
                        pltpu.VMEM((C, tile_l), jnp.float32)],
        compiler_params=pltpu.CompilerParams(
            dimension_semantics=("parallel", "arbitrary"),
            vmem_limit_bytes=_VMEM_LIMIT),
    )(xtap, wk, bias_col)


def _pass2_apply(y, scale, shift, *, tile_l, l_valid, relu, out_dtype):
    N, C, L_p = y.shape
    grid = (N, L_p // tile_l)
    out = pl.pallas_call(
        partial(_scale_shift_act_kernel, relu=relu),
        grid=grid,
        in_specs=[
            pl.BlockSpec((1, C, tile_l), lambda n, j: (n, 0, j)),
            pl.BlockSpec((C, 1), lambda n, j: (0, 0)),
            pl.BlockSpec((C, 1), lambda n, j: (0, 0)),
        ],
        out_specs=pl.BlockSpec((1, C, tile_l), lambda n, j: (n, 0, j)),
        out_shape=jax.ShapeDtypeStruct((N, C, L_p), out_dtype),
        compiler_params=pltpu.CompilerParams(
            dimension_semantics=("parallel", "parallel"),
            vmem_limit_bytes=_VMEM_LIMIT),
    )(y, scale, shift)
    return out[:, :, :l_valid]


# ---------------------------------------------------------------------------
# Public forward: mirrors Mnasnet.conv  (Conv1d -> BatchNorm1d(batch stats,
# skipped when L_out == 1) -> optional ReLU).  x is PyTorch NCL layout.
# ---------------------------------------------------------------------------
def conv_block(x, weight, bias, gamma, beta, *, stride=1, groups=1,
               use_activation=True, eps=1e-5,
               compute_dtype=jnp.bfloat16, out_dtype=jnp.bfloat16, block_l=512):
    N, Cin, L = x.shape
    Cout, Cin_g, K = weight.shape
    pad = K // 2
    L_out = (L + 2 * pad - K) // stride + 1
    apply_bn = (L_out != 1)                      # mirrors `if x.size()[-1] != 1:`

    block_l = _round_up(max(block_l, 128), 128)
    tile_l = min(block_l, _round_up(L_out, 128))
    L_p = _round_up(L_out, tile_l)
    pad_lanes = L_p - L_out

    x_pad = jnp.pad(x, ((0, 0), (0, 0), (pad, pad))) if pad else x
    x_pad = x_pad.astype(compute_dtype)

    bias_col = bias.reshape(Cout, 1).astype(jnp.float32)

    if groups == 1:
        assert Cin_g == Cin
        # Wrapper-side im2col (k-major).  Zero-cost for 1x1/stride-1 convs,
        # which dominate MnasNet; the only K>1 dense conv is the Cin=3 stem.
        if K == 1 and stride == 1:
            xcol = x_pad
        else:
            taps = [lax.slice(x_pad, (0, 0, k),
                              (N, Cin, k + (L_out - 1) * stride + 1),
                              (1, 1, stride)) for k in range(K)]
            xcol = jnp.concatenate(taps, axis=1)                 # (N, K*Cin, L_out)
        xcol = jnp.pad(xcol, ((0, 0), (0, 0), (0, L_p - xcol.shape[-1])))
        w2 = jnp.transpose(weight, (0, 2, 1)).reshape(Cout, K * Cin)
        w2 = w2.astype(compute_dtype)
        y, s1, s2 = _pass1_dense(xcol, w2, bias_col, tile_l=tile_l)
    elif groups == Cin and Cout == Cin and Cin_g == 1:
        # Depthwise conv: stack the K (strided) taps in the wrapper, reduce on VPU.
        # TODO(synk): replace the K-fold tap stack with in-kernel halo blocks.
        taps = [lax.slice(x_pad, (0, 0, k),
                          (N, Cin, k + (L_out - 1) * stride + 1),
                          (1, 1, stride)) for k in range(K)]
        xtap = jnp.stack(taps, axis=1)                           # (N, K, C, L_out)
        xtap = jnp.pad(xtap, ((0, 0), (0, 0), (0, 0), (0, pad_lanes)))
        wk = jnp.transpose(weight.reshape(Cout, K), (1, 0))[:, :, None]  # (K, C, 1)
        wk = wk.astype(compute_dtype)
        y, s1, s2 = _pass1_depthwise(xtap, wk, bias_col, tile_l=tile_l)
    else:
        # TODO(synk): general grouped conv (1 < groups < channels), used by SepConv.
        raise NotImplementedError("only groups=1 or depthwise (groups == channels)")

    if apply_bn:
        count = float(N * L_out)
        tot1 = jnp.sum(s1, axis=0)[:, 0]
        tot2 = jnp.sum(s2, axis=0)[:, 0]
        if pad_lanes:
            # Zero-padded tail lanes of pass 1 are exactly `bias`; remove their
            # contribution analytically instead of masking every tile in-kernel.
            bcorr = bias.astype(jnp.float32)
            tot1 = tot1 - float(N * pad_lanes) * bcorr
            tot2 = tot2 - float(N * pad_lanes) * (bcorr * bcorr)
        mean = tot1 / count
        var = jnp.maximum(tot2 / count - mean * mean, 0.0)       # biased batch variance
        scale = gamma.astype(jnp.float32) * lax.rsqrt(var + eps)
        shift = beta.astype(jnp.float32) - mean * scale
    else:
        scale = jnp.ones((Cout,), jnp.float32)
        shift = jnp.zeros((Cout,), jnp.float32)

    return _pass2_apply(y, scale.reshape(Cout, 1), shift.reshape(Cout, 1),
                        tile_l=tile_l, l_valid=L_out, relu=use_activation,
                        out_dtype=out_dtype)


# ---------------------------------------------------------------------------
# Pure-JAX reference mirroring the kernel's dtype policy: bf16 conv inputs,
# f32 accumulation, bf16 pass-1 intermediate, f32 BatchNorm/bias/ReLU, bf16
# inter-layer activations -- semantics of Mnasnet.conv (training batch stats).
# ---------------------------------------------------------------------------
def _reference_conv_block(x, weight, bias, gamma, beta, *, stride, groups,
                          use_activation, eps=1e-5,
                          compute_dtype=jnp.bfloat16, out_dtype=jnp.bfloat16):
    K = weight.shape[-1]
    pad = K // 2
    y32 = lax.conv_general_dilated(
        x.astype(compute_dtype), weight.astype(compute_dtype),
        window_strides=(stride,), padding=[(pad, pad)],
        dimension_numbers=("NCH", "OIH", "NCH"),
        feature_group_count=groups,
        preferred_element_type=jnp.float32)
    y32 = y32 + bias.astype(jnp.float32)[None, :, None]
    # Mirror the kernel: stats come from the f32 conv output, but the values
    # that get normalized went through a bf16 HBM round-trip.
    yq = y32.astype(compute_dtype).astype(jnp.float32)
    if y32.shape[-1] != 1:
        m = jnp.mean(y32, axis=(0, 2), keepdims=True)
        v = jnp.mean((y32 - m) ** 2, axis=(0, 2), keepdims=True)
        y = (yq - m) * lax.rsqrt(v + eps)
        y = (y * gamma.astype(jnp.float32)[None, :, None]
             + beta.astype(jnp.float32)[None, :, None])
    else:
        y = yq
    if use_activation:
        y = jnp.maximum(y, 0.0)
    return y.astype(out_dtype)


if __name__ == "__main__":
    key = jax.random.PRNGKey(0)
    keys = jax.random.split(key, 8)

    def make_params(k, cin, cout, ksz, groups):
        k1, k2, k3, k4 = jax.random.split(k, 4)
        w = jax.random.normal(k1, (cout, cin // groups, ksz), jnp.float32) * 0.2
        b = jax.random.normal(k2, (cout,), jnp.float32) * 0.1
        gamma = 1.0 + 0.1 * jax.random.normal(k3, (cout,), jnp.float32)
        beta = 0.1 * jax.random.normal(k4, (cout,), jnp.float32)
        return w, b, gamma, beta

    N, L = 2, 500
    x = jax.random.normal(keys[0], (N, 3, L), jnp.float32)

    # A slice of MnasNetA1: stem conv, then an MBConv-style (expand -> depthwise
    # -> project) block.   (cin, cout, K, stride, groups, use_activation)
    layers = [
        (3, 32, 3, 2, 1, False),    # stem: conv(3, 32, 3, stride=2, use_activation=False)
        (32, 96, 1, 1, 1, True),    # MBConv expand 1x1
        (96, 96, 3, 2, 96, True),   # MBConv depthwise k=3 stride=2
        (96, 24, 1, 1, 1, False),   # MBConv project 1x1, no activation
    ]

    cur = x
    for i, (cin, cout, ksz, s, g, act) in enumerate(layers):
        w, b, gamma, beta = make_params(keys[i + 1], cin, cout, ksz, g)
        out = conv_block(cur, w, b, gamma, beta, stride=s, groups=g,
                         use_activation=act)
        out = jax.block_until_ready(out)
        ref = _reference_conv_block(cur, w, b, gamma, beta, stride=s, groups=g,
                                    use_activation=act)
        assert out.shape == ref.shape, (out.shape, ref.shape)
        assert out.dtype == ref.dtype, (out.dtype, ref.dtype)
        diff = jnp.abs(out.astype(jnp.float32) - ref.astype(jnp.float32))
        max_err = float(jnp.max(diff))
        mean_err = float(jnp.mean(diff))
        assert max_err < 6e-2 and mean_err < 5e-3, (i, max_err, mean_err)
        cur = out

    print("KERNEL_OK")
</pallas_src>

<mosaic_0001>
module attributes {stable_mosaic.version = 11 : i64} {
  func.func @_dense_conv_stats_kernel(%arg0: i32, %arg1: i32, %arg2: memref<1x9x256xbf16, #tpu.memory_space<vmem>>, %arg3: memref<32x9xbf16, #tpu.memory_space<vmem>>, %arg4: memref<32x1xf32, #tpu.memory_space<vmem>>, %arg5: memref<1x32x256xbf16, #tpu.memory_space<vmem>>, %arg6: memref<1x32x1xf32, #tpu.memory_space<vmem>>, %arg7: memref<1x32x1xf32, #tpu.memory_space<vmem>>, %arg8: memref<32x256xf32, #tpu.memory_space<vmem>>, %arg9: memref<32x256xf32, #tpu.memory_space<vmem>>) attributes {dimension_semantics = [#tpu.dimension_semantics<parallel>, #tpu.dimension_semantics<arbitrary>], iteration_bounds = array<i64: 2, 1>, scalar_prefetch = 0 : i64, scratch_operands = 2 : i64, tpu.core_type = #tpu.core_type<tc>, window_params = [{transform_indices = @transform_0, window_bounds = array<i64: 1, 9, 256>}, {pipeline_mode = #tpu.pipeline_mode<synchronous>, transform_indices = @transform_1, window_bounds = array<i64: 32, 9>}, {pipeline_mode = #tpu.pipeline_mode<synchronous>, transform_indices = @transform_2, window_bounds = array<i64: 32, 1>}, {transform_indices = @transform_3, window_bounds = array<i64: 1, 32, 256>}, {transform_indices = @transform_4, window_bounds = array<i64: 1, 32, 1>}, {transform_indices = @transform_5, window_bounds = array<i64: 1, 32, 1>}]} {
    %c0_i32 = arith.constant 0 : i32
    %0 = arith.cmpi eq, %arg1, %c0_i32 : i32
    %1 = arith.extui %0 : i1 to i32
    %c0_i32_0 = arith.constant 0 : i32
    %2 = arith.cmpi ne, %1, %c0_i32_0 : i32
    scf.if %2 {
      %cst_20 = arith.constant 0.000000e+00 : f32
      %24 = vector.broadcast %cst_20 : f32 to vector<32x256xf32>
      %c0_21 = arith.constant 0 : index
      %c0_22 = arith.constant 0 : index
      %25 = vector.load %arg8[%c0_21, %c0_22] : memref<32x256xf32, #tpu.memory_space<vmem>>, vector<32x256xf32>
      tpu.vector_store %arg8[%c0_21, %c0_22], %24 {strides = array<i32>} : memref<32x256xf32, #tpu.memory_space<vmem>>, vector<32x256xf32>,
      %cst_23 = arith.constant 0.000000e+00 : f32
      %26 = vector.broadcast %cst_23 : f32 to vector<32x256xf32>
      %c0_24 = arith.constant 0 : index
      %c0_25 = arith.constant 0 : index
      %27 = vector.load %arg9[%c0_24, %c0_25] : memref<32x256xf32, #tpu.memory_space<vmem>>, vector<32x256xf32>
      tpu.vector_store %arg9[%c0_24, %c0_25], %26 {strides = array<i32>} : memref<32x256xf32, #tpu.memory_space<vmem>>, vector<32x256xf32>,
    } else {
    }
    %c0 = arith.constant 0 : index
    %c0_1 = arith.constant 0 : index
    %c0_2 = arith.constant 0 : index
    %3 = vector.load %arg2[%c0, %c0_1, %c0_2] : memref<1x9x256xbf16, #tpu.memory_space<vmem>>, vector<1x9x256xbf16>
    %4 = vector.shape_cast %3 : vector<1x9x256xbf16> to vector<9x256xbf16>
    %c0_3 = arith.constant 0 : index
    %c0_4 = arith.constant 0 : index
    %5 = vector.load %arg3[%c0_3, %c0_4] : memref<32x9xbf16, #tpu.memory_space<vmem>>, vector<32x9xbf16>
    %cst = arith.constant dense<0.000000e+00> : vector<32x256xf32>
    %6 = tpu.matmul %5, %4, %cst {dimension_numbers = #tpu.dot_dimension_numbers<[1], [0], [0], [1], [0, 0, 1, 1], [], []>} : vector<32x9xbf16>, vector<9x256xbf16>, vector<32x256xf32> -> vector<32x256xf32>
    %c0_5 = arith.constant 0 : index
    %c0_6 = arith.constant 0 : index
    %7 = vector.load %arg4[%c0_5, %c0_6] : memref<32x1xf32, #tpu.memory_space<vmem>>, vector<32x1xf32>
    %8 = vector.broadcast %7 : vector<32x1xf32> to vector<32x256xf32>
    %9 = arith.addf %6, %8 : vector<32x256xf32>
    %10 = arith.truncf %9 : vector<32x256xf32> to vector<32x256xbf16>
    %c0_7 = arith.constant 0 : index
    %c0_8 = arith.constant 0 : index
    %c0_9 = arith.constant 0 : index
    %11 = vector.load %arg5[%c0_7, %c0_8, %c0_9] : memref<1x32x256xbf16, #tpu.memory_space<vmem>>, vector<1x32x256xbf16>
    %12 = vector.shape_cast %11 : vector<1x32x256xbf16> to vector<32x256xbf16>
    %13 = vector.shape_cast %10 : vector<32x256xbf16> to vector<1x32x256xbf16>
    tpu.vector_store %arg5[%c0_7, %c0_8, %c0_9], %13 {strides = array<i32>} : memref<1x32x256xbf16, #tpu.memory_space<vmem>>, vector<1x32x256xbf16>,
    %c0_10 = arith.constant 0 : index
    %c0_11 = arith.constant 0 : index
    %14 = vector.load %arg8[%c0_10, %c0_11] : memref<32x256xf32, #tpu.memory_space<vmem>>, vector<32x256xf32>
    %15 = arith.addf %14, %9 : vector<32x256xf32>
    %c0_12 = arith.constant 0 : index
    %c0_13 = arith.constant 0 : index
    %16 = vector.load %arg8[%c0_12, %c0_13] : memref<32x256xf32, #tpu.memory_space<vmem>>, vector<32x256xf32>
    tpu.vector_store %arg8[%c0_12, %c0_13], %15 {strides = array<i32>} : memref<32x256xf32, #tpu.memory_space<vmem>>, vector<32x256xf32>,
    %c0_14 = arith.constant 0 : index
    %c0_15 = arith.constant 0 : index
    %17 = vector.load %arg9[%c0_14, %c0_15] : memref<32x256xf32, #tpu.memory_space<vmem>>, vector<32x256xf32>
    %18 = arith.mulf %9, %9 : vector<32x256xf32>
    %19 = arith.addf %17, %18 : vector<32x256xf32>
    %c0_16 = arith.constant 0 : index
    %c0_17 = arith.constant 0 : index
    %20 = vector.load %arg9[%c0_16, %c0_17] : memref<32x256xf32, #tpu.memory_space<vmem>>, vector<32x256xf32>
    tpu.vector_store %arg9[%c0_16, %c0_17], %19 {strides = array<i32>} : memref<32x256xf32, #tpu.memory_space<vmem>>, vector<32x256xf32>,
    %c0_i32_18 = arith.constant 0 : i32
    %21 = arith.cmpi eq, %arg1, %c0_i32_18 : i32
    %22 = arith.extui %21 : i1 to i32
    %c0_i32_19 = arith.constant 0 : i32
    %23 = arith.cmpi ne, %22, %c0_i32_19 : i32
    scf.if %23 {
      %c0_20 = arith.constant 0 : index
      %c0_21 = arith.constant 0 : index
      %24 = vector.load %arg8[%c0_20, %c0_21] : memref<32x256xf32, #tpu.memory_space<vmem>>, vector<32x256xf32>
      %cst_22 = arith.constant dense<0.000000e+00> : vector<32xf32>
      %25 = vector.multi_reduction <add>, %24, %cst_22 [1] : vector<32x256xf32> to vector<32xf32>
      %26 = vector.shape_cast %25 : vector<32xf32> to vector<32x1xf32>
      %c0_23 = arith.constant 0 : index
      %c0_24 = arith.constant 0 : index
      %c0_25 = arith.constant 0 : index
      %27 = vector.load %arg6[%c0_23, %c0_24, %c0_25] : memref<1x32x1xf32, #tpu.memory_space<vmem>>, vector<1x32x1xf32>
      %28 = vector.shape_cast %27 : vector<1x32x1xf32> to vector<32x1xf32>
      %29 = vector.shape_cast %26 : vector<32x1xf32> to vector<1x32x1xf32>
      tpu.vector_store %arg6[%c0_23, %c0_24, %c0_25], %29 {strides = array<i32>} : memref<1x32x1xf32, #tpu.memory_space<vmem>>, vector<1x32x1xf32>,
      %c0_26 = arith.constant 0 : index
      %c0_27 = arith.constant 0 : index
      %30 = vector.load %arg9[%c0_26, %c0_27] : memref<32x256xf32, #tpu.memory_space<vmem>>, vector<32x256xf32>
      %cst_28 = arith.constant dense<0.000000e+00> : vector<32xf32>
      %31 = vector.multi_reduction <add>, %30, %cst_28 [1] : vector<32x256xf32> to vector<32xf32>
      %32 = vector.shape_cast %31 : vector<32xf32> to vector<32x1xf32>
      %c0_29 = arith.constant 0 : index
      %c0_30 = arith.constant 0 : index
      %c0_31 = arith.constant 0 : index
      %33 = vector.load %arg7[%c0_29, %c0_30, %c0_31] : memref<1x32x1xf32, #tpu.memory_space<vmem>>, vector<1x32x1xf32>
      %34 = vector.shape_cast %33 : vector<1x32x1xf32> to vector<32x1xf32>
      %35 = vector.shape_cast %32 : vector<32x1xf32> to vector<1x32x1xf32>
      tpu.vector_store %arg7[%c0_29, %c0_30, %c0_31], %35 {strides = array<i32>} : memref<1x32x1xf32, #tpu.memory_space<vmem>>, vector<1x32x1xf32>,
    } else {
    }
    return
  }
  func.func @transform_0(%arg0: i32, %arg1: i32) -> (i32, i32, i32) {
    %c0_i32 = arith.constant 0 : i32
    %c0_i32_0 = arith.constant 0 : i32
    return %arg0, %c0_i32, %arg1 : i32, i32, i32
  }
  func.func @transform_1(%arg0: i32, %arg1: i32) -> (i32, i32) {
    %c0_i32 = arith.constant 0 : i32
    %c0_i32_0 = arith.constant 0 : i32
    %c0_i32_1 = arith.constant 0 : i32
    return %c0_i32, %c0_i32_0 : i32, i32
  }
  func.func @transform_2(%arg0: i32, %arg1: i32) -> (i32, i32) {
    %c0_i32 = arith.constant 0 : i32
    %c0_i32_0 = arith.constant 0 : i32
    %c0_i32_1 = arith.constant 0 : i32
    return %c0_i32, %c0_i32_0 : i32, i32
  }
  func.func @transform_3(%arg0: i32, %arg1: i32) -> (i32, i32, i32) {
    %c0_i32 = arith.constant 0 : i32
    %c0_i32_0 = arith.constant 0 : i32
    return %arg0, %c0_i32, %arg1 : i32, i32, i32
  }
  func.func @transform_4(%arg0: i32, %arg1: i32) -> (i32, i32, i32) {
    %c0_i32 = arith.constant 0 : i32
    %c0_i32_0 = arith.constant 0 : i32
    %c0_i32_1 = arith.constant 0 : i32
    return %arg0, %c0_i32, %c0_i32_0 : i32, i32, i32
  }
  func.func @transform_5(%arg0: i32, %arg1: i32) -> (i32, i32, i32) {
    %c0_i32 = arith.constant 0 : i32
    %c0_i32_0 = arith.constant 0 : i32
    %c0_i32_1 = arith.constant 0 : i32
    return %arg0, %c0_i32, %c0_i32_0 : i32, i32, i32
  }
}

</mosaic_0001>

<llo_original>
// kernel: tpu_custom_call.1
$region0: #{tpu_custom_call.1}
  #allocation0 [shape = 'u32[]', space=smem, size = 0x4, offset = 0x4, fixed_abs, tag = 'smem constant byte address 0x4 - core index']
  #allocation1 [shape = 'u32[144,128]{1,0:T(1,128)}', space=vmem, size = 0x12000, scoped, tag = 'internal scratch']
  #allocation2 [shape = 'f32[32,256]{1,0:T(8,128)}', space=vmem, size = 0x8000, scoped, tag = 'scratch operand']
  #allocation3 [shape = 'f32[32,256]{1,0:T(8,128)}', space=vmem, size = 0x8000, scoped, tag = 'scratch operand']
  %s0 = inlined_call_operand.vmem [shape: bf16[2,9,256], index: 0, kind: input, shape index: {}]
  %s1 = inlined_call_operand.vmem [shape: bf16[32,9], index: 1, kind: input, shape index: {}]
  %s2 = inlined_call_operand.vmem [shape: f32[32,1], index: 2, kind: input, shape index: {}]
  %s3 = inlined_call_operand.hbm [shape: bf16[2,32,256], index: 3, kind: output, shape index: {0}]
  %s4 = inlined_call_operand.vmem [shape: f32[2,32,1], index: 4, kind: output, shape index: {1}]
  %s5 = inlined_call_operand.vmem [shape: f32[2,32,1], index: 5, kind: output, shape index: {2}]
  %6 = xla_tuple %s3, %s4, %s5
  %s7 = sld [smem:[#allocation0]]
  $region69: #{tpu_custom_call.1} parent=0
    _
  %s9 = ssub.s32 1, %s7
  %s10 = scalar_select 0, %s9, %s7
  $region1: #{tpu_custom_call.1} parent=0
    #allocation4 [shape = 'u8[32768]{0}', space=vmem, size = 0x8000, scoped, tag = 'output window, operand 0']
    #allocation5 [shape = 's32[2]{0}', space=sflag, size = 0x8, scoped, tag = 'scoped memory for tpu_custom_call.1']
    %11 = vsyncpa [#allocation5], 0
    %s12 = scalar_lea.sflag [#allocation5], 1
    %13 = vsyncpa %s12, 0
    loop: start=0, step=1, limit=4
    $region2: #{tpu_custom_call.1} parent=1 // loop_pre_header
      _
    $region3: #{tpu_custom_call.1} parent=1 // loop_header
      %s15 = sphi 0, %s19
      %p16 = scmp.ge.s32.totalorder %s15, 4
      %s22 = sphi 0, %s34
      %s23 = sphi 0, %s30
      %s24 = sphi 0, %s22
      %s25 = sphi 0, %s23
      %s26 = sphi 0, %s24
      %s27 = sphi 0, %s25
      %s39 = sphi 0, %s41
      %s42 = sphi 0, %s39
      %s43 = sphi 0, %s42
      %s59 = sphi 0, %s43
      %s63 = sphi 0, %s63
      %s65 = sphi 0, %s63
      %s66 = sphi 0, %s65
      %s80 = sphi 0, %s66
      %s84 = sphi 0, %s84
      %s86 = sphi 0, %s84
      %s87 = sphi 0, %s86
      %s101 = sphi 0, %s87
      %s109 = sphi 0, %s111
      %s112 = sphi 0, %s109
      %s113 = sphi 0, %s112
      %s129 = sphi 0, %s113
      %s135 = sphi 0, %s137
      %s138 = sphi 0, %s135
      %s139 = sphi 0, %s138
      %s155 = sphi 0, %s139
      %s161 = sphi 0, %s163
      %s164 = sphi 0, %s161
      %s165 = sphi 0, %s164
      %s181 = sphi 0, %s165
    $region4: #{tpu_custom_call.1} parent=1 // loop_header_branch
      %18 = sbr.rel (%p16) target = $region8
    $region5: #{tpu_custom_call.1} parent=1 // loop_body
      %s20 = ssub.s32 %s15, 1
      %s21 = ssub.s32 %s15, 2
      %s28 = sadd.s32 1, %s23
      %p29 = scmp.ge.s32.totalorder %s28, 1
      %s30 = scalar_select %p29, 0, %s28
      %s31 = sadd.s32 1, %s22
      %s32 = scalar_select %p29, %s31, %s22
      %p33 = scmp.ge.s32.totalorder %s32, 2
      %s34 = scalar_select %p33, 0, %s32
      %s35 = ssub.s32 %s22, %s34
      %s36 = ssub.s32 %s23, %s30
      %s37 = sor.u32 %s35, %s36
      %p38 = scmp.eq.s32.totalorder %s37, 0
      %s40 = sadd.s32 %s39, 1
      %s41 = scalar_select %p38, %s39, %s40
      %p44 = pneg %p38
      %p45 = scmp.eq.s32.totalorder %s15, 1
      %p46 = por %p44, %p45
      %p47 = scmp.ne.s32.totalorder %s39, %s42
      %p48 = scmp.eq.s32.totalorder %s15, 0
      %p49 = por %p47, %p48
      %p50 = scmp.ne.s32.totalorder %s39, %s42
      %p51 = scmp.eq.s32.totalorder %s20, 1
      %p52 = por %p50, %p51
      %p53 = scmp.ne.s32.totalorder %s42, %s43
      %p54 = scmp.eq.s32.totalorder %s20, 0
      %p55 = por %p53, %p54
      %p56 = scmp.ne.s32.totalorder %s42, %s43
      %p57 = scmp.eq.s32.totalorder %s21, 1
      %p58 = por %p56, %p57
      %p60 = scmp.ne.s32.totalorder %s43, %s59
      %p61 = scmp.eq.s32.totalorder %s21, 0
      %p62 = por %p60, %p61
      %s64 = sadd.s32 %s63, 1
      %p67 = scmp.eq.s32.totalorder %s15, 1
      %p68 = scmp.ne.s32.totalorder %s63, %s65
      %p69 = scmp.eq.s32.totalorder %s15, 0
      %p70 = por %p68, %p69
      %p71 = scmp.ne.s32.totalorder %s63, %s65
      %p72 = scmp.eq.s32.totalorder %s20, 1
      %p73 = por %p71, %p72
      %p74 = scmp.ne.s32.totalorder %s65, %s66
      %p75 = scmp.eq.s32.totalorder %s20, 0
      %p76 = por %p74, %p75
      %p77 = scmp.ne.s32.totalorder %s65, %s66
      %p78 = scmp.eq.s32.totalorder %s21, 1
      %p79 = por %p77, %p78
      %p81 = scmp.ne.s32.totalorder %s66, %s80
      %p82 = scmp.eq.s32.totalorder %s21, 0
      %p83 = por %p81, %p82
      %s85 = sadd.s32 %s84, 1
      %p88 = scmp.eq.s32.totalorder %s15, 1
      %p89 = scmp.ne.s32.totalorder %s84, %s86
      %p90 = scmp.eq.s32.totalorder %s15, 0
      %p91 = por %p89, %p90
      %p92 = scmp.ne.s32.totalorder %s84, %s86
      %p93 = scmp.eq.s32.totalorder %s20, 1
      %p94 = por %p92, %p93
      %p95 = scmp.ne.s32.totalorder %s86, %s87
      %p96 = scmp.eq.s32.totalorder %s20, 0
      %p97 = por %p95, %p96
      %p98 = scmp.ne.s32.totalorder %s86, %s87
      %p99 = scmp.eq.s32.totalorder %s21, 1
      %p100 = por %p98, %p99
      %p102 = scmp.ne.s32.totalorder %s87, %s101
      %p103 = scmp.eq.s32.totalorder %s21, 0
      %p104 = por %p102, %p103
      %s105 = ssub.s32 %s22, %s34
      %s106 = ssub.s32 %s23, %s30
      %s107 = sor.u32 %s105, %s106
      %p108 = scmp.eq.s32.totalorder %s107, 0
      %s110 = sadd.s32 %s109, 1
      %s111 = scalar_select %p108, %s109, %s110
      %p114 = pneg %p108
      %p115 = scmp.eq.s32.totalorder %s15, 1
      %p116 = por %p114, %p115
      %p117 = scmp.ne.s32.totalorder %s109, %s112
      %p118 = scmp.eq.s32.totalorder %s15, 0
      %p119 = por %p117, %p118
      %p120 = scmp.ne.s32.totalorder %s109, %s112
      %p121 = scmp.eq.s32.totalorder %s20, 1
      %p122 = por %p120, %p121
      %p123 = scmp.ne.s32.totalorder %s112, %s113
      %p124 = scmp.eq.s32.totalorder %s20, 0
      %p125 = por %p123, %p124
      %p126 = scmp.ne.s32.totalorder %s112, %s113
      %p127 = scmp.eq.s32.totalorder %s21, 1
      %p128 = por %p126, %p127
      %p130 = scmp.ne.s32.totalorder %s113, %s129
      %p131 = scmp.eq.s32.totalorder %s21, 0
      %p132 = por %p130, %p131
      %s133 = ssub.s32 %s22, %s34
      %p134 = scmp.eq.s32.totalorder %s133, 0
      %s136 = sadd.s32 %s135, 1
      %s137 = scalar_select %p134, %s135, %s136
      %p140 = pneg %p134
      %p141 = scmp.eq.s32.totalorder %s15, 1
      %p142 = por %p140, %p141
      %p143 = scmp.ne.s32.totalorder %s135, %s138
      %p144 = scmp.eq.s32.totalorder %s15, 0
      %p145 = por %p143, %p144
      %p146 = scmp.ne.s32.totalorder %s135, %s138
      %p147 = scmp.eq.s32.totalorder %s20, 1
      %p148 = por %p146, %p147
      %p149 = scmp.ne.s32.totalorder %s138, %s139
      %p150 = scmp.eq.s32.totalorder %s20, 0
      %p151 = por %p149, %p150
      %p152 = scmp.ne.s32.totalorder %s138, %s139
      %p153 = scmp.eq.s32.totalorder %s21, 1
      %p154 = por %p152, %p153
      %p156 = scmp.ne.s32.totalorder %s139, %s155
      %p157 = scmp.eq.s32.totalorder %s21, 0
      %p158 = por %p156, %p157
      %s159 = ssub.s32 %s22, %s34
      %p160 = scmp.eq.s32.totalorder %s159, 0
      %s162 = sadd.s32 %s161, 1
      %s163 = scalar_select %p160, %s161, %s162
      %p166 = pneg %p160
      %p167 = scmp.eq.s32.totalorder %s15, 1
      %p168 = por %p166, %p167
      %p169 = scmp.ne.s32.totalorder %s161, %s164
      %p170 = scmp.eq.s32.totalorder %s15, 0
      %p171 = por %p169, %p170
      %p172 = scmp.ne.s32.totalorder %s161, %s164
      %p173 = scmp.eq.s32.totalorder %s20, 1
      %p174 = por %p172, %p173
      %p175 = scmp.ne.s32.totalorder %s164, %s165
      %p176 = scmp.eq.s32.totalorder %s20, 0
      %p177 = por %p175, %p176
      %p178 = scmp.ne.s32.totalorder %s164, %s165
      %p179 = scmp.eq.s32.totalorder %s21, 1
      %p180 = por %p178, %p179
      %p182 = scmp.ne.s32.totalorder %s165, %s181
      %p183 = scmp.eq.s32.totalorder %s21, 0
      %p184 = por %p182, %p183
      %p185 = scmp.le.s32.totalorder 1, %s15
      %p186 = scmp.lt.s32.totalorder %s15, 3
      %p187 = pnand %p185, %p186
      %p188 = pneg %p187
      // Predicated region
      $region9: #{tpu_custom_call.1} parent=5 // pred_check
        _
      $region10: #{tpu_custom_call.1} parent=5 // pred_check_branch
        %190 = sbr.rel (%p187) target = $region12
      $region11: #{tpu_custom_call.1} parent=5 // pred_region
        %s191 = ssub.s32 %s15, 1
        // Predicated region
        $region13: #{tpu_custom_call.1} parent=11 // pred_check
          %p192 = pneg %p76
        $region14: #{tpu_custom_call.1} parent=11 // pred_check_branch
          %194 = sbr.rel (%p192) target = $region16
        $region15: #{tpu_custom_call.1} parent=11 // pred_region
          _
        $region16: #{tpu_custom_call.1} parent=11 // pred_fallthru
          _
        // Predicated region
        $region17: #{tpu_custom_call.1} parent=11 // pred_check
          %p195 = pneg %p97
        $region18: #{tpu_custom_call.1} parent=11 // pred_check_branch
          %197 = sbr.rel (%p195) target = $region20
        $region19: #{tpu_custom_call.1} parent=11 // pred_region
          _
        $region20: #{tpu_custom_call.1} parent=11 // pred_fallthru
          _
      $region12: #{tpu_custom_call.1} parent=5 // pred_fallthru
        _
      %p198 = scmp.lt.s32.totalorder %s15, 2
      // Predicated region
      $region21: #{tpu_custom_call.1} parent=5 // pred_check
        %p199 = pneg %p198
      $region22: #{tpu_custom_call.1} parent=5 // pred_check_branch
        %201 = sbr.rel (%p199) target = $region24
      $region23: #{tpu_custom_call.1} parent=5 // pred_region
        // Predicated region
        $region25: #{tpu_custom_call.1} parent=23 // pred_check
          %p202 = pneg %p49
        $region26: #{tpu_custom_call.1} parent=23 // pred_check_branch
          %204 = sbr.rel (%p202) target = $region28
        $region27: #{tpu_custom_call.1} parent=23 // pred_region
          %s205 = smul.u32 2, %s23
          %p206 = scmp.lt.s32.totalorder %s22, 1
          %s207 = scalar_select %p206, %s22, 1
          %p208 = scmp.lt.s32.totalorder %s205, 1
          %s209 = scalar_select %p208, %s205, 1
          %s210 = smul.addr %s207, 4
          %s211 = sadd.s32 %s209, %s210
          %s212 = smul.addr %s211, 4
          %s213 = scalar_lea.vmem %s0, %s212
          %s214 = smul.u32 2, %s23
        $region28: #{tpu_custom_call.1} parent=23 // pred_fallthru
          _
      $region24: #{tpu_custom_call.1} parent=5 // pred_fallthru
        _
      %p215 = scmp.le.s32.totalorder 1, %s15
      %p216 = scmp.lt.s32.totalorder %s15, 3
      %p217 = pnand %p215, %p216
      %p218 = pneg %p217
      // Predicated region
      $region29: #{tpu_custom_call.1} parent=5 // pred_check
        _
      $region30: #{tpu_custom_call.1} parent=5 // pred_check_branch
        %220 = sbr.rel (%p217) target = $region32
      $region31: #{tpu_custom_call.1} parent=5 // pred_region
        %s221 = ssub.s32 %s15, 1
        %s222 = smul.u32 2, %s25
        %p223 = scmp.lt.s32.totalorder %s24, 1
        %s224 = scalar_select %p223, %s24, 1
        %p225 = scmp.lt.s32.totalorder %s222, 1
        %s226 = scalar_select %p225, %s222, 1
        %s227 = smul.addr %s224, 4
        %s228 = sadd.s32 %s226, %s227
        %s229 = smul.addr %s228, 4
        %s230 = scalar_lea.vmem %s0, %s229
        %p231 = pneg %p55
        %p232 = pneg %p52
        %p233 = pneg %p76
        %p234 = pneg %p73
        %p235 = pneg %p97
        %p236 = pneg %p94
        %p237 = pneg %p125
        %p238 = pneg %p122
        %s239 = sand.u32 %s112, 1
        %s240 = scalar_lea.sflag [#allocation5], %s239
        %s241 = sand.u32 %s112, 1
        %s242 = smul.addr %s241, 32
        %s243 = scalar_lea.vmem [#allocation4], %s242
        %p244 = pneg %p151
        %p245 = pneg %p148
        %p246 = scmp.lt.s32.totalorder %s24, 1
        %s247 = scalar_select %p246, %s24, 1
        %s248 = smul.addr %s247, 4
        %s249 = smul.addr %s248, 8
        %s250 = scalar_lea.vmem %s4, %s249
        %p251 = pneg %p177
        %p252 = pneg %p174
        %p253 = scmp.lt.s32.totalorder %s24, 1
        %s254 = scalar_select %p253, %s24, 1
        %s255 = smul.addr %s254, 4
        %s256 = smul.addr %s255, 8
        %s257 = scalar_lea.vmem %s5, %s256
        %s258 = smul.u32 2, %s25
        %p259 = scmp.lt.s32.totalorder %s24, 1
        %s260 = scalar_select %p259, %s24, 1
        %p261 = scmp.lt.s32.totalorder %s258, 1
        %s262 = scalar_select %p261, %s258, 1
        %s263 = smul.addr %s260, 4
        %s264 = sadd.s32 %s262, %s263
        %s265 = smul.addr %s264, 4
        %s266 = scalar_lea.vmem %s0, %s265
        %s267 = smul.u32 2, %s25
        %s268 = smul.u32 2, %s25
        %p269 = scmp.lt.s32.totalorder %s24, 1
        %s270 = scalar_select %p269, %s24, 1
        %s271 = smul.addr %s270, 4
        %s272 = smul.addr %s271, 8
        %s273 = scalar_lea.vmem %s4, %s272
        %p274 = scmp.lt.s32.totalorder %s24, 1
        %s275 = scalar_select %p274, %s24, 1
        %s276 = smul.addr %s275, 4
        %s277 = smul.addr %s276, 8
        %s278 = scalar_lea.vmem %s5, %s277
        %p280 = scmp.eq.s32.totalorder %s25, 0
        // Predicated region
        $region33: #{tpu_custom_call.1} parent=31 // pred_check
          %p281 = pneg %p280
        $region34: #{tpu_custom_call.1} parent=31 // pred_check_branch
          %283 = sbr.rel (%p281) target = $region36
        $region35: #{tpu_custom_call.1} parent=31 // pred_region
          %284 = vst [vmem:[#allocation2] sm:$0xff] 0.0
          %285 = vst [vmem:[#allocation2 + $0x8] sm:$0xff] 0.0
          %286 = vst [vmem:[#allocation2 + $0x10] sm:$0xff] 0.0
          %287 = vst [vmem:[#allocation2 + $0x18] sm:$0xff] 0.0
          %288 = vst [vmem:[#allocation2 + $0x20] sm:$0xff] 0.0
          %289 = vst [vmem:[#allocation2 + $0x28] sm:$0xff] 0.0
          %290 = vst [vmem:[#allocation2 + $0x30] sm:$0xff] 0.0
          %291 = vst [vmem:[#allocation2 + $0x38] sm:$0xff] 0.0
          %292 = vst [vmem:[#allocation3] sm:$0xff] 0.0
          %293 = vst [vmem:[#allocation3 + $0x8] sm:$0xff] 0.0
          %294 = vst [vmem:[#allocation3 + $0x10] sm:$0xff] 0.0
          %295 = vst [vmem:[#allocation3 + $0x18] sm:$0xff] 0.0
          %296 = vst [vmem:[#allocation3 + $0x20] sm:$0xff] 0.0
          %297 = vst [vmem:[#allocation3 + $0x28] sm:$0xff] 0.0
          %298 = vst [vmem:[#allocation3 + $0x30] sm:$0xff] 0.0
          %299 = vst [vmem:[#allocation3 + $0x38] sm:$0xff] 0.0
        $region36: #{tpu_custom_call.1} parent=31 // pred_fallthru
          _
        %v300 = vld [vmem:[%s266] sm:$0xff]
        %v301 = vld [vmem:[%s266 + $0x8] sm:$0x11]
        %v302 = vld [vmem:[%s1] sm:$0xf]
        %v303 = vld [vmem:[%s1 + $0x4] sm:$0xf]
        %v304 = vld [vmem:[%s1 + $0x8] sm:$0xf]
        %v305 = vld [vmem:[%s1 + $0xc] sm:$0xf]
        %v306 = vld [vmem:[%s2] sm:$0xff]
        %v307 = vld [vmem:[%s2 + $0x8] sm:$0xff]
        %v308 = vld [vmem:[%s2 + $0x10] sm:$0xff]
        %v309 = vld [vmem:[%s2 + $0x18] sm:$0xff]
        %311 = vset.pattern.permute.xlu0 0
        %312 = vperm.xlu0 %311, %v306
        %v313 = vpop.permute.xlu0 %312
        %316 = vset.pattern.permute.xlu0 0
        %317 = vperm.xlu0 %316, %v307
        %v318 = vpop.permute.xlu0 %317
        %321 = vset.pattern.permute.xlu0 0
        %322 = vperm.xlu0 %321, %v308
        %v323 = vpop.permute.xlu0 %322
        %326 = vset.pattern.permute.xlu0 0
        %327 = vperm.xlu0 %326, %v309
        %v328 = vpop.permute.xlu0 %327
        %v334 = vunpack.c.l.b16 %v302
        %v335 = vunpack.c.l.b16 %v303
        %v336 = vunpack.c.l.b16 %v304
        %v337 = vunpack.c.l.b16 %v305
        %v338 = vpack.c.b16 %v335, %v334
        %v339 = vpack.c.b16 %v337, %v336
        %v342 = vunpack.c.l.b16 %v300
        %v343 = vunpack.c.h.b16 %v300
        %v344 = vunpack.c.l.b16 %v301
        %v345 = vunpack.c.h.b16 %v301
        %v346 = vpack.c.b16 %v344, %v342
        %v347 = vpack.c.b16 %v345, %v343
        %vm348 = vcmask 72704
        %v350 = vsel %vm348, %v338, 0
        %v353 = vsel %vm348, %v339, 0
        %vm355 = vcmask 1043456
        %vm356 = vcmask 1044480
        %v357 = vsel %vm355, 4294967295, 65535
        %v358 = vsel %vm356, %v357, 0
        %v360 = vand.u32 %v346, %v358
        %v363 = vand.u32 %v347, %v358
        %365 = vmatprep.subr.bf16.mxu0 %v363
        %366 = vmatpush1.bf16.msra.mxu0 %v360
        %367 = vmatprep.subr.bf16.mxu0 0
        %368 = vmatpush1.bf16.msra.mxu0 0
        %369 = vmatprep.subr.bf16.mxu0 0
        %370 = vmatpush1.bf16.msra.mxu0 0
        %371 = vmatprep.subr.bf16.mxu0 0
        %372 = vmatpush1.bf16.msra.mxu0 0
        %373 = vmatprep.subr.bf16.mxu0 0
        %374 = vmatpush1.bf16.msra.mxu0 0
        %375 = vmatprep.subr.bf16.mxu0 0
        %376 = vmatpush1.bf16.msra.mxu0 0
        %377 = vmatprep.subr.bf16.mxu0 0
        %378 = vmatpush1.bf16.msra.mxu0 0
        %379 = vmatprep.subr.bf16.mxu0 0
        %380 = vmatpush1.bf16.msra.mxu0 0
        %381 = vmatprep.subr.bf16.mxu0 0
        %382 = vmatpush1.bf16.msra.mxu0 0
        %383 = vmatprep.subr.bf16.mxu0 0
        %384 = vmatpush1.bf16.msra.mxu0 0
        %385 = vmatprep.subr.bf16.mxu0 0
        %386 = vmatpush1.bf16.msra.mxu0 0
        %387 = vmatprep.subr.bf16.mxu0 0
        %388 = vmatpush1.bf16.msra.mxu0 0
        %389 = vmatprep.subr.bf16.mxu0 0
        %390 = vmatpush1.bf16.msra.mxu0 0
        %391 = vmatprep.subr.bf16.mxu0 0
        %392 = vmatpush1.bf16.msra.mxu0 0
        %393 = vmatprep.subr.bf16.mxu0 0
        %394 = vmatpush1.bf16.msra.mxu0 0
        %395 = vmatprep.subr.bf16.mxu0 0
        %396 = vmatpush1.bf16.msra.mxu0 0
        %397 = vmatprep.mubr.bf16.mxu0 0
        %398 = vmatmul.mubr.bf16.gmra.mrb[0].mxu0 %v350
        %v399 = vpop.f32.mrb[0].mxu0
        %v400 = vadd.f32 %v313, %v399
        %v401 = vpop.f32.mrb[0].mxu0
        %v402 = vadd.f32 %v313, %v401
        %v403 = vpop.f32.mrb[0].mxu0
        %v404 = vadd.f32 %v318, %v403
        %v405 = vpop.f32.mrb[0].mxu0
        %v406 = vadd.f32 %v318, %v405
        %407 = vmatprep.mubr.bf16.mxu0 0
        %408 = vmatmul.mubr.bf16.gmra.mrb[0].mxu0 %v353
        %v409 = vpop.f32.mrb[0].mxu0
        %v410 = vadd.f32 %v323, %v409
        %v411 = vpop.f32.mrb[0].mxu0
        %v412 = vadd.f32 %v323, %v411
        %v413 = vpop.f32.mrb[0].mxu0
        %v414 = vadd.f32 %v328, %v413
        %v415 = vpop.f32.mrb[0].mxu0
        %v416 = vadd.f32 %v328, %v415
        %417 = vdwg.mxu0
        %v418 = vpack.c.bf16 %v404, %v400
        %v419 = vpack.c.bf16 %v406, %v402
        %v420 = vpack.c.bf16 %v414, %v410
        %v421 = vpack.c.bf16 %v416, %v412
        %v426 = vunpack.c.l.b16 %v418
        %v427 = vunpack.c.l.b16 %v419
        %v428 = vunpack.c.h.b16 %v418
        %v429 = vunpack.c.h.b16 %v419
        %v430 = vunpack.c.l.b16 %v420
        %v431 = vunpack.c.l.b16 %v421
        %v432 = vunpack.c.h.b16 %v420
        %v433 = vunpack.c.h.b16 %v421
        %v434 = vpack.c.b16 %v427, %v426
        %v435 = vpack.c.b16 %v429, %v428
        %v436 = vpack.c.b16 %v431, %v430
        %v437 = vpack.c.b16 %v433, %v432
        %442 = vst [vmem:[%s243] sm:$0xff] %v434
        %443 = vst [vmem:[%s243 + $0x8] sm:$0xff] %v435
        %444 = vst [vmem:[%s243 + $0x10] sm:$0xff] %v436
        %445 = vst [vmem:[%s243 + $0x18] sm:$0xff] %v437
        %v446 = vld [vmem:[#allocation2] sm:$0xff]
        %v447 = vld [vmem:[#allocation2 + $0x8] sm:$0xff]
        %v448 = vld [vmem:[#allocation2 + $0x10] sm:$0xff]
        %v449 = vld [vmem:[#allocation2 + $0x18] sm:$0xff]
        %v450 = vld [vmem:[#allocation2 + $0x20] sm:$0xff]
        %v451 = vld [vmem:[#allocation2 + $0x28] sm:$0xff]
        %v452 = vld [vmem:[#allocation2 + $0x30] sm:$0xff]
        %v453 = vld [vmem:[#allocation2 + $0x38] sm:$0xff]
        %v454 = vadd.f32 %v446, %v400
        %v455 = vadd.f32 %v447, %v402
        %v456 = vadd.f32 %v448, %v404
        %v457 = vadd.f32 %v449, %v406
        %v458 = vadd.f32 %v450, %v410
        %v459 = vadd.f32 %v451, %v412
        %v460 = vadd.f32 %v452, %v414
        %v461 = vadd.f32 %v453, %v416
        %462 = vst [vmem:[#allocation2] sm:$0xff] %v454
        %463 = vst [vmem:[#allocation2 + $0x8] sm:$0xff] %v455
        %464 = vst [vmem:[#allocation2 + $0x10] sm:$0xff] %v456
        %465 = vst [vmem:[#allocation2 + $0x18] sm:$0xff] %v457
        %466 = vst [vmem:[#allocation2 + $0x20] sm:$0xff] %v458
        %467 = vst [vmem:[#allocation2 + $0x28] sm:$0xff] %v459
        %468 = vst [vmem:[#allocation2 + $0x30] sm:$0xff] %v460
        %469 = vst [vmem:[#allocation2 + $0x38] sm:$0xff] %v461
        %v470 = vld [vmem:[#allocation3] sm:$0xff]
        %v471 = vld [vmem:[#allocation3 + $0x8] sm:$0xff]
        %v472 = vld [vmem:[#allocation3 + $0x10] sm:$0xff]
        %v473 = vld [vmem:[#allocation3 + $0x18] sm:$0xff]
        %v474 = vld [vmem:[#allocation3 + $0x20] sm:$0xff]
        %v475 = vld [vmem:[#allocation3 + $0x28] sm:$0xff]
        %v476 = vld [vmem:[#allocation3 + $0x30] sm:$0xff]
        %v477 = vld [vmem:[#allocation3 + $0x38] sm:$0xff]
        %v478 = vmul.f32 %v400, %v400
        %v479 = vmul.f32 %v402, %v402
        %v480 = vmul.f32 %v404, %v404
        %v481 = vmul.f32 %v406, %v406
        %v482 = vmul.f32 %v410, %v410
        %v483 = vmul.f32 %v412, %v412
        %v484 = vmul.f32 %v414, %v414
        %v485 = vmul.f32 %v416, %v416
        %v486 = vadd.f32 %v470, %v478
        %v487 = vadd.f32 %v471, %v479
        %v488 = vadd.f32 %v472, %v480
        %v489 = vadd.f32 %v473, %v481
        %v490 = vadd.f32 %v474, %v482
        %v491 = vadd.f32 %v475, %v483
        %v492 = vadd.f32 %v476, %v484
        %v493 = vadd.f32 %v477, %v485
        %494 = vst [vmem:[#allocation3] sm:$0xff] %v486
        %495 = vst [vmem:[#allocation3 + $0x8] sm:$0xff] %v487
        %496 = vst [vmem:[#allocation3 + $0x10] sm:$0xff] %v488
        %497 = vst [vmem:[#allocation3 + $0x18] sm:$0xff] %v489
        %498 = vst [vmem:[#allocation3 + $0x20] sm:$0xff] %v490
        %499 = vst [vmem:[#allocation3 + $0x28] sm:$0xff] %v491
        %500 = vst [vmem:[#allocation3 + $0x30] sm:$0xff] %v492
        %501 = vst [vmem:[#allocation3 + $0x38] sm:$0xff] %v493
        // Predicated region
        $region37: #{tpu_custom_call.1} parent=31 // pred_check
          %p502 = pneg %p280
        $region38: #{tpu_custom_call.1} parent=31 // pred_check_branch
          %504 = sbr.rel (%p502) target = $region40
        $region39: #{tpu_custom_call.1} parent=31 // pred_region
          %v505 = vld [vmem:[#allocation2] sm:$0xff]
          %v506 = vld [vmem:[#allocation2 + $0x8] sm:$0xff]
          %v507 = vld [vmem:[#allocation2 + $0x10] sm:$0xff]
          %v508 = vld [vmem:[#allocation2 + $0x18] sm:$0xff]
          %v509 = vld [vmem:[#allocation2 + $0x20] sm:$0xff]
          %v510 = vld [vmem:[#allocation2 + $0x28] sm:$0xff]
          %v511 = vld [vmem:[#allocation2 + $0x30] sm:$0xff]
          %v512 = vld [vmem:[#allocation2 + $0x38] sm:$0xff]
          %v513 = vadd.f32 %v505, %v506
          %514 = vadd.xlane.f32.xlu0 %v513
          %v515 = vpop.xlane.xlu0 %514
          %v516 = vadd.f32 %v507, %v508
          %517 = vadd.xlane.f32.xlu0 %v516
          %v518 = vpop.xlane.xlu0 %517
          %v519 = vadd.f32 %v509, %v510
          %520 = vadd.xlane.f32.xlu0 %v519
          %v521 = vpop.xlane.xlu0 %520
          %v522 = vadd.f32 %v511, %v512
          %523 = vadd.xlane.f32.xlu0 %v522
          %v524 = vpop.xlane.xlu0 %523
          %vm525 = vcmask 7168
          %526 = vst.msk [vmem:[%s273] sm:$0xff] %vm525, %v515
          %527 = vst.msk [vmem:[%s273 + $0x8] sm:$0xff] %vm525, %v518
          %528 = vst.msk [vmem:[%s273 + $0x10] sm:$0xff] %vm525, %v521
          %529 = vst.msk [vmem:[%s273 + $0x18] sm:$0xff] %vm525, %v524
          %v530 = vld [vmem:[#allocation3] sm:$0xff]
          %v531 = vld [vmem:[#allocation3 + $0x8] sm:$0xff]
          %v532 = vld [vmem:[#allocation3 + $0x10] sm:$0xff]
          %v533 = vld [vmem:[#allocation3 + $0x18] sm:$0xff]
          %v534 = vld [vmem:[#allocation3 + $0x20] sm:$0xff]
          %v535 = vld [vmem:[#allocation3 + $0x28] sm:$0xff]
          %v536 = vld [vmem:[#allocation3 + $0x30] sm:$0xff]
          %v537 = vld [vmem:[#allocation3 + $0x38] sm:$0xff]
          %v538 = vadd.f32 %v530, %v531
          %539 = vadd.xlane.f32.xlu0 %v538
          %v540 = vpop.xlane.xlu0 %539
          %v541 = vadd.f32 %v532, %v533
          %542 = vadd.xlane.f32.xlu0 %v541
          %v543 = vpop.xlane.xlu0 %542
          %v544 = vadd.f32 %v534, %v535
          %545 = vadd.xlane.f32.xlu0 %v544
          %v546 = vpop.xlane.xlu0 %545
          %v547 = vadd.f32 %v536, %v537
          %548 = vadd.xlane.f32.xlu0 %v547
          %v549 = vpop.xlane.xlu0 %548
          %550 = vst.msk [vmem:[%s278] sm:$0xff] %vm525, %v540
          %551 = vst.msk [vmem:[%s278 + $0x8] sm:$0xff] %vm525, %v543
          %552 = vst.msk [vmem:[%s278 + $0x10] sm:$0xff] %vm525, %v546
          %553 = vst.msk [vmem:[%s278 + $0x18] sm:$0xff] %vm525, %v549
        $region40: #{tpu_custom_call.1} parent=31 // pred_fallthru
          _
        %s554 = sand.u32 %s112, 1
        %s555 = scalar_lea.sflag [#allocation5], %s554
        %s556 = sand.u32 %s112, 1
        %s557 = smul.addr %s556, 32
        %s558 = scalar_lea.vmem [#allocation4], %s557
        %p559 = scmp.lt.s32.totalorder %s24, 1
        %s560 = scalar_select %p559, %s24, 1
        %s561 = smul.addr %s560, 4
        %s562 = smul.addr %s561, 8
        %s563 = scalar_lea.vmem %s4, %s562
        %p564 = scmp.lt.s32.totalorder %s24, 1
        %s565 = scalar_select %p564, %s24, 1
        %s566 = smul.addr %s565, 4
        %s567 = smul.addr %s566, 8
        %s568 = scalar_lea.vmem %s5, %s567
        // Predicated region
        $region41: #{tpu_custom_call.1} parent=31 // pred_check
          %p569 = pneg %p122
        $region42: #{tpu_custom_call.1} parent=31 // pred_check_branch
          %571 = sbr.rel (%p569) target = $region44
        $region43: #{tpu_custom_call.1} parent=31 // pred_region
          %s572 = smul.u32 2, %s25
          %s574 = ssub.s32 512, 512
          %575 = vsyncadd %s555, %s574
          %s576 = smul.addr %s24, 8
          %s577 = sadd.s32 %s572, %s576
          %s578 = smul.addr %s577, 64
          %s579 = scalar_lea.hbm %s3, %s578
          %s580 = sshll.u32 %s558, 4
          %s581 = int_to_ptr.vmem [resolvable:$true] %s580
          %586 = dma.vmem_to_hbm [thread:$0]  %s581, 512, %s579, %s555, 128, 128, 8
        $region44: #{tpu_custom_call.1} parent=31 // pred_fallthru
          _
        // Predicated region
        $region45: #{tpu_custom_call.1} parent=31 // pred_check
          %p587 = pneg %p148
        $region46: #{tpu_custom_call.1} parent=31 // pred_check_branch
          %589 = sbr.rel (%p587) target = $region48
        $region47: #{tpu_custom_call.1} parent=31 // pred_region
          _
        $region48: #{tpu_custom_call.1} parent=31 // pred_fallthru
          _
        // Predicated region
        $region49: #{tpu_custom_call.1} parent=31 // pred_check
          %p590 = pneg %p174
        $region50: #{tpu_custom_call.1} parent=31 // pred_check_branch
          %592 = sbr.rel (%p590) target = $region52
        $region51: #{tpu_custom_call.1} parent=31 // pred_region
          _
        $region52: #{tpu_custom_call.1} parent=31 // pred_fallthru
          _
      $region32: #{tpu_custom_call.1} parent=5 // pred_fallthru
        _
      %p593 = scmp.le.s32.totalorder 2, %s15
      // Predicated region
      $region53: #{tpu_custom_call.1} parent=5 // pred_check
        %p594 = pneg %p593
      $region54: #{tpu_custom_call.1} parent=5 // pred_check_branch
        %596 = sbr.rel (%p594) target = $region56
      $region55: #{tpu_custom_call.1} parent=5 // pred_region
        %s597 = ssub.s32 %s15, 2
        // Predicated region
        $region57: #{tpu_custom_call.1} parent=55 // pred_check
          %p598 = pneg %p128
        $region58: #{tpu_custom_call.1} parent=55 // pred_check_branch
          %600 = sbr.rel (%p598) target = $region60
        $region59: #{tpu_custom_call.1} parent=55 // pred_region
          %s601 = sand.u32 %s113, 1
          %s602 = scalar_lea.sflag [#allocation5], %s601
          %s603 = sand.u32 %s113, 1
          %s604 = smul.addr %s603, 32
          %s605 = scalar_lea.vmem [#allocation4], %s604
          %606 = dma.done %s602, 512
        $region60: #{tpu_custom_call.1} parent=55 // pred_fallthru
          _
        // Predicated region
        $region61: #{tpu_custom_call.1} parent=55 // pred_check
          %p607 = pneg %p154
        $region62: #{tpu_custom_call.1} parent=55 // pred_check_branch
          %609 = sbr.rel (%p607) target = $region64
        $region63: #{tpu_custom_call.1} parent=55 // pred_region
          %p610 = scmp.lt.s32.totalorder %s26, 1
          %s611 = scalar_select %p610, %s26, 1
          %s612 = smul.addr %s611, 4
          %s613 = smul.addr %s612, 8
          %s614 = scalar_lea.vmem %s4, %s613
        $region64: #{tpu_custom_call.1} parent=55 // pred_fallthru
          _
        // Predicated region
        $region65: #{tpu_custom_call.1} parent=55 // pred_check
          %p615 = pneg %p180
        $region66: #{tpu_custom_call.1} parent=55 // pred_check_branch
          %617 = sbr.rel (%p615) target = $region68
        $region67: #{tpu_custom_call.1} parent=55 // pred_region
          %p618 = scmp.lt.s32.totalorder %s26, 1
          %s619 = scalar_select %p618, %s26, 1
          %s620 = smul.addr %s619, 4
          %s621 = smul.addr %s620, 8
          %s622 = scalar_lea.vmem %s5, %s621
        $region68: #{tpu_custom_call.1} parent=55 // pred_fallthru
          _
      $region56: #{tpu_custom_call.1} parent=5 // pred_fallthru
        _
    $region6: #{tpu_custom_call.1} parent=1 // loop_footer
      %s19 = sadd.s32 1, %s15
    $region7: #{tpu_custom_call.1} parent=1 // loop_footer_branch
      %14 = sbr.rel target = $region3
    $region8: #{tpu_custom_call.1} parent=1 // loop_exit
      _
    %623 = vsyncpa [#allocation5], 1
    %s624 = scalar_lea.sflag [#allocation5], 1
    %625 = vsyncpa %s624, 1

</llo_original>
